<compile_context>
chip_gen: v5e
topology: v5e:2x2
jax: 0.10.0
libtpu: 0.0.40
codegen_flags: <defaults>
</compile_context>

<pallas_src>
import functools

import jax
import jax.numpy as jnp
from jax import lax
from jax.experimental import pallas as pl
from jax.experimental.pallas import tpu as pltpu


def _patch_shifting_kernel(x_ref, o_ref, *, shift, width):
    """x_ref: (Bt, C, H*W)   o_ref: (Bt, C+4, H*W)."""
    Bt, C, HW = x_ref.shape
    s = shift
    sW = s * width

    # Flat spatial index p = i*W + j and its column j, for the padding masks.
    # Hoisted out of the per-batch loop (broadcasts are not CSE'd).
    p = lax.broadcasted_iota(jnp.int32, (1, HW), 1)
    col = p % width
    mask_l = col >= s            # valid lanes for m[p - s]   (left-pad columns -> 0)
    mask_r = col < width - s     # valid lanes for m[p + s]   (right-pad columns -> 0)
    mask_t = p >= sW             # valid lanes for m[p - s*W] (top-pad rows -> 0)
    mask_b = p < HW - sW         # valid lanes for m[p + s*W] (bottom-pad rows -> 0)

    @pl.loop(0, Bt)
    def _(b):
        xb = x_ref[b]                                                  # (C, HW)

        # Channel mean in f32 (matches torch .mean over dim=1).
        m = jnp.mean(xb.astype(jnp.float32), axis=0, keepdims=True)   # (1, HW)

        # Cyclic lane rotations on the mean row; semantics match np.roll
        # (out[p] = in[(p - shift) mod HW]).  Negative shifts expressed as
        # positive HW - k.  Wrap-around lanes are exactly the masked ones.
        left  = pltpu.roll(m, s, 1)           # m[p - s]
        right = pltpu.roll(m, HW - s, 1)      # m[p + s]
        up    = pltpu.roll(m, sW, 1)          # m[p - s*W]
        down  = pltpu.roll(m, HW - sW, 1)     # m[p + s*W]

        zero = jnp.zeros_like(m)
        shifts = jnp.concatenate(
            [jnp.where(mask_l, left, zero),    # x_l2
             jnp.where(mask_r, right, zero),   # x_r2
             jnp.where(mask_t, up, zero),      # x_t2
             jnp.where(mask_b, down, zero)],   # x_b2
            axis=0)                                                    # (4, HW)

        o_ref[b, pl.ds(0, C), :] = xb                                  # pass-through
        o_ref[b, pl.ds(C, 4), :] = shifts.astype(o_ref.dtype)          # one fused store


def patch_shifting(x, patch_size, *, vmem_budget_bytes=8 * 1024 * 1024):
    """out = PatchShifting(patch_size)(x) for x of shape (B, C, H, W)."""
    B, C, H, W = x.shape
    shift = patch_size // 2
    assert shift >= 1, "patch_size must be >= 2"
    assert shift <= H, "shift must not exceed the image height"
    HW = H * W

    # Flatten spatial dims onto one lane axis; blocks span the full (C, HW)
    # dims so this is correct for any H*W.
    # TODO(synk): for H*W not a multiple of 128, pad the flattened axis up to a
    # lane multiple in the wrapper (and crop after) so stores stay lane-dense.
    x_flat = x.reshape(B, C, HW)

    # Size the batch block Bt against VMEM: double-buffered input + output per
    # batch element is 2*(C + (C+4))*HW*itemsize.  An 8 MiB budget fits the
    # default scoped VMEM on all generations (16 MiB v5e, 32 MiB v6e/v7x) and
    # is already far past the ~1-4 MiB block size needed to reach HBM roofline.
    itemsize = jnp.dtype(x.dtype).itemsize
    per_sample = 2 * (C + (C + 4)) * HW * itemsize
    bt = int(max(1, min(B, vmem_budget_bytes // per_sample)))
    # Keep >= 2 grid steps when possible so both v7x TensorCores get work.
    if bt >= B and B >= 2:
        bt = (B + 1) // 2
    grid_b = pl.cdiv(B, bt)

    kernel = functools.partial(_patch_shifting_kernel, shift=shift, width=W)

    out_flat = pl.pallas_call(
        kernel,
        out_shape=jax.ShapeDtypeStruct((B, C + 4, HW), x.dtype),
        grid=(grid_b,),
        in_specs=[pl.BlockSpec((bt, C, HW), lambda b: (b, 0, 0))],
        out_specs=pl.BlockSpec((bt, C + 4, HW), lambda b: (b, 0, 0)),
        compiler_params=pltpu.CompilerParams(
            dimension_semantics=("parallel",)),
    )(x_flat)

    return out_flat.reshape(B, C + 4, H, W)


if __name__ == "__main__":
    key = jax.random.PRNGKey(0)
    B, C, H, W = 2, 4, 16, 16
    patch_size = 4                      # shift = 2
    x = jax.random.normal(key, (B, C, H, W), dtype=jnp.float32)

    out = patch_shifting(x, patch_size)
    out = jax.block_until_ready(out)

    # Pure-JAX reference mirroring the PyTorch forward.
    s = patch_size // 2
    x_pad = jnp.pad(x, ((0, 0), (0, 0), (s, s), (s, s)))
    m = x_pad.mean(axis=1, keepdims=True)
    x_l2 = m[:, :, s:-s, :-2 * s]
    x_r2 = m[:, :, s:-s, 2 * s:]
    x_t2 = m[:, :, :-2 * s, s:-s]
    x_b2 = m[:, :, 2 * s:, s:-s]
    ref = jnp.concatenate([x, x_l2, x_r2, x_t2, x_b2], axis=1)

    assert out.shape == ref.shape, (out.shape, ref.shape)
    assert jnp.allclose(out, ref, atol=1e-5, rtol=1e-5), "mismatch vs reference"

    print("KERNEL_OK")
</pallas_src>

<mosaic_0001>
module attributes {stable_mosaic.version = 11 : i64} {
  func.func @_patch_shifting_kernel(%arg0: i32, %arg1: memref<1x4x256xf32, #tpu.memory_space<vmem>>, %arg2: memref<1x8x256xf32, #tpu.memory_space<vmem>>) attributes {dimension_semantics = [#tpu.dimension_semantics<parallel>], iteration_bounds = array<i64: 2>, scalar_prefetch = 0 : i64, scratch_operands = 0 : i64, tpu.core_type = #tpu.core_type<tc>, window_params = [{transform_indices = @transform_0, window_bounds = array<i64: 1, 4, 256>}, {transform_indices = @transform_1, window_bounds = array<i64: 1, 8, 256>}]} {
    %0 = tpu.iota {dimensions = array<i32: 1>} : vector<1x256xi32>
    %c16_i32 = arith.constant 16 : i32
    %c0_i32 = arith.constant 0 : i32
    %1 = arith.cmpi eq, %c16_i32, %c0_i32 : i32
    %c1_i32 = arith.constant 1 : i32
    %2 = arith.select %1, %c1_i32, %c16_i32 : i32
    %3 = vector.broadcast %2 : i32 to vector<1x256xi32>
    %4 = arith.remsi %0, %3 : vector<1x256xi32>
    %c0_i32_0 = arith.constant 0 : i32
    %5 = vector.broadcast %c0_i32_0 : i32 to vector<1x256xi32>
    %6 = arith.cmpi ne, %4, %5 : vector<1x256xi32>
    %c0_i32_1 = arith.constant 0 : i32
    %7 = vector.broadcast %c0_i32_1 : i32 to vector<1x256xi32>
    %8 = arith.cmpi slt, %4, %7 : vector<1x256xi32>
    %c0_i32_2 = arith.constant 0 : i32
    %9 = arith.cmpi slt, %2, %c0_i32_2 : i32
    %10 = vector.broadcast %9 : i1 to vector<1x256xi1>
    %11 = vector.broadcast %10 : vector<1x256xi1> to vector<1x256xi1>
    %12 = arith.xori %8, %11 : vector<1x256xi1>
    %13 = arith.andi %12, %6 : vector<1x256xi1>
    %14 = vector.broadcast %2 : i32 to vector<1x256xi32>
    %15 = arith.addi %4, %14 : vector<1x256xi32>
    %16 = arith.select %13, %15, %4 : vector<1x256xi1>, vector<1x256xi32>
    %c2_i32 = arith.constant 2 : i32
    %17 = vector.broadcast %c2_i32 : i32 to vector<1x256xi32>
    %18 = arith.cmpi sge, %16, %17 : vector<1x256xi32>
    %c14_i32 = arith.constant 14 : i32
    %19 = vector.broadcast %c14_i32 : i32 to vector<1x256xi32>
    %20 = arith.cmpi slt, %16, %19 : vector<1x256xi32>
    %c32_i32 = arith.constant 32 : i32
    %21 = vector.broadcast %c32_i32 : i32 to vector<1x256xi32>
    %22 = arith.cmpi sge, %0, %21 : vector<1x256xi32>
    %c224_i32 = arith.constant 224 : i32
    %23 = vector.broadcast %c224_i32 : i32 to vector<1x256xi32>
    %24 = arith.cmpi slt, %0, %23 : vector<1x256xi32>
    %c0_i32_3 = arith.constant 0 : i32
    %c1_i32_4 = arith.constant 1 : i32
    %25 = arith.muli %c0_i32_3, %c1_i32_4 : i32
    %c0_i32_5 = arith.constant 0 : i32
    %26 = arith.addi %c0_i32_5, %25 : i32
    %27 = arith.index_cast %26 : i32 to index
    %c0 = arith.constant 0 : index
    %c0_6 = arith.constant 0 : index
    %28 = vector.load %arg1[%27, %c0, %c0_6] : memref<1x4x256xf32, #tpu.memory_space<vmem>>, vector<1x4x256xf32>
    %29 = vector.shape_cast %28 : vector<1x4x256xf32> to vector<4x256xf32>
    %cst = arith.constant dense<0.000000e+00> : vector<256xf32>
    %30 = vector.multi_reduction <add>, %29, %cst [0] : vector<4x256xf32> to vector<256xf32>
    %31 = vector.shape_cast %30 : vector<256xf32> to vector<1x256xf32>
    %cst_7 = arith.constant 4.000000e+00 : f32
    %32 = vector.broadcast %cst_7 : f32 to vector<1x256xf32>
    %33 = arith.divf %31, %32 : vector<1x256xf32>
    %c2_i32_8 = arith.constant 2 : i32
    %34 = tpu.dynamic_rotate %33 by %c2_i32_8 dim 1 : vector<1x256xf32>, i32 -> vector<1x256xf32>
    %c254_i32 = arith.constant 254 : i32
    %35 = tpu.dynamic_rotate %33 by %c254_i32 dim 1 : vector<1x256xf32>, i32 -> vector<1x256xf32>
    %c32_i32_9 = arith.constant 32 : i32
    %36 = tpu.dynamic_rotate %33 by %c32_i32_9 dim 1 : vector<1x256xf32>, i32 -> vector<1x256xf32>
    %c224_i32_10 = arith.constant 224 : i32
    %37 = tpu.dynamic_rotate %33 by %c224_i32_10 dim 1 : vector<1x256xf32>, i32 -> vector<1x256xf32>
    %cst_11 = arith.constant 0.000000e+00 : f32
    %38 = vector.broadcast %cst_11 : f32 to vector<1x256xf32>
    %39 = arith.select %18, %34, %38 : vector<1x256xi1>, vector<1x256xf32>
    %40 = arith.select %20, %35, %38 : vector<1x256xi1>, vector<1x256xf32>
    %41 = arith.select %22, %36, %38 : vector<1x256xi1>, vector<1x256xf32>
    %42 = arith.select %24, %37, %38 : vector<1x256xi1>, vector<1x256xf32>
    %43 = tpu.concatenate %39, %40, %41, %42 in 0 : vector<1x256xf32>, vector<1x256xf32>, vector<1x256xf32>, vector<1x256xf32> -> vector<4x256xf32>
    %44 = arith.index_cast %26 : i32 to index
    %c0_12 = arith.constant 0 : index
    %c0_13 = arith.constant 0 : index
    %45 = vector.load %arg2[%44, %c0_12, %c0_13] : memref<1x8x256xf32, #tpu.memory_space<vmem>>, vector<1x4x256xf32>
    %46 = vector.shape_cast %45 : vector<1x4x256xf32> to vector<4x256xf32>
    %47 = vector.shape_cast %29 : vector<4x256xf32> to vector<1x4x256xf32>
    tpu.vector_store %arg2[%44, %c0_12, %c0_13], %47 {strides = array<i32>} : memref<1x8x256xf32, #tpu.memory_space<vmem>>, vector<1x4x256xf32>,
    %48 = arith.index_cast %26 : i32 to index
    %c4 = arith.constant 4 : index
    %c0_14 = arith.constant 0 : index
    %49 = vector.load %arg2[%48, %c4, %c0_14] : memref<1x8x256xf32, #tpu.memory_space<vmem>>, vector<1x4x256xf32>
    %50 = vector.shape_cast %49 : vector<1x4x256xf32> to vector<4x256xf32>
    %51 = vector.shape_cast %43 : vector<4x256xf32> to vector<1x4x256xf32>
    tpu.vector_store %arg2[%48, %c4, %c0_14], %51 {strides = array<i32>} : memref<1x8x256xf32, #tpu.memory_space<vmem>>, vector<1x4x256xf32>,
    %c1_i32_15 = arith.constant 1 : i32
    return
  }
  func.func @transform_0(%arg0: i32) -> (i32, i32, i32) {
    %c0_i32 = arith.constant 0 : i32
    %c0_i32_0 = arith.constant 0 : i32
    %c0_i32_1 = arith.constant 0 : i32
    return %arg0, %c0_i32, %c0_i32_0 : i32, i32, i32
  }
  func.func @transform_1(%arg0: i32) -> (i32, i32, i32) {
    %c0_i32 = arith.constant 0 : i32
    %c0_i32_0 = arith.constant 0 : i32
    %c0_i32_1 = arith.constant 0 : i32
    return %arg0, %c0_i32, %c0_i32_0 : i32, i32, i32
  }
}

</mosaic_0001>

<llo_original>
// kernel: tpu_custom_call.1
$region0: #{tpu_custom_call.1}
  #allocation0 [shape = 'u32[]', space=smem, size = 0x4, offset = 0x4, fixed_abs, tag = 'smem constant byte address 0x4 - core index']
  #allocation1 [shape = 'u32[72,128]{1,0:T(1,128)}', space=vmem, size = 0x9000, scoped, tag = 'internal scratch']
  %s0 = inlined_call_operand.hbm [shape: f32[2,4,256], index: 0, kind: input, shape index: {}]
  %s1 = inlined_call_operand.hbm [shape: f32[2,8,256], index: 1, kind: output, shape index: {}]
  %s2 = sld [smem:[#allocation0]]
  $region41: #{tpu_custom_call.1} parent=0
    _
  %s4 = ssub.s32 1, %s2
  %s5 = scalar_select 0, %s4, %s2
  $region1: #{tpu_custom_call.1} parent=0
    #allocation2 [shape = 'u8[8192]{0}', space=vmem, size = 0x2000, scoped, tag = 'input window, operand 0']
    #allocation3 [shape = 's32[2]{0}', space=sflag, size = 0x8, scoped, tag = 'scoped memory for tpu_custom_call.1']
    #allocation4 [shape = 's32[2]{0}', space=sflag, size = 0x8, scoped, tag = 'scoped memory for tpu_custom_call.1']
    #allocation5 [shape = 'u8[16384]{0}', space=vmem, size = 0x4000, scoped, tag = 'output window, operand 0']
    %6 = vsyncpa [#allocation3], 0
    %s7 = scalar_lea.sflag [#allocation3], 1
    %8 = vsyncpa %s7, 0
    %9 = vsyncpa [#allocation4], 0
    %s10 = scalar_lea.sflag [#allocation4], 1
    %11 = vsyncpa %s10, 0
    loop: start=0, step=1, limit=4
    $region2: #{tpu_custom_call.1} parent=1 // loop_pre_header
      _
    $region3: #{tpu_custom_call.1} parent=1 // loop_header
      %s13 = sphi 0, %s17
      %p14 = scmp.ge.s32.totalorder %s13, 4
      %s23 = sphi 0, %s25
      %s26 = sphi 0, %s23
      %s27 = sphi 0, %s26
      %s43 = sphi 0, %s27
      %s49 = sphi 0, %s51
      %s52 = sphi 0, %s49
      %s53 = sphi 0, %s52
      %s69 = sphi 0, %s53
    $region4: #{tpu_custom_call.1} parent=1 // loop_header_branch
      %16 = sbr.rel (%p14) target = $region8
    $region5: #{tpu_custom_call.1} parent=1 // loop_body
      %s18 = ssub.s32 %s13, 1
      %s19 = ssub.s32 %s13, 2
      %s20 = sadd.s32 %s13, 1
      %s21 = ssub.s32 %s13, %s20
      %p22 = scmp.eq.s32.totalorder %s21, 0
      %s24 = sadd.s32 %s23, 1
      %s25 = scalar_select %p22, %s23, %s24
      %p28 = pneg %p22
      %p29 = scmp.eq.s32.totalorder %s13, 1
      %p30 = por %p28, %p29
      %p31 = scmp.ne.s32.totalorder %s23, %s26
      %p32 = scmp.eq.s32.totalorder %s13, 0
      %p33 = por %p31, %p32
      %p34 = scmp.ne.s32.totalorder %s23, %s26
      %p35 = scmp.eq.s32.totalorder %s18, 1
      %p36 = por %p34, %p35
      %p37 = scmp.ne.s32.totalorder %s26, %s27
      %p38 = scmp.eq.s32.totalorder %s18, 0
      %p39 = por %p37, %p38
      %p40 = scmp.ne.s32.totalorder %s26, %s27
      %p41 = scmp.eq.s32.totalorder %s19, 1
      %p42 = por %p40, %p41
      %p44 = scmp.ne.s32.totalorder %s27, %s43
      %p45 = scmp.eq.s32.totalorder %s19, 0
      %p46 = por %p44, %p45
      %s47 = ssub.s32 %s13, %s20
      %p48 = scmp.eq.s32.totalorder %s47, 0
      %s50 = sadd.s32 %s49, 1
      %s51 = scalar_select %p48, %s49, %s50
      %p54 = pneg %p48
      %p55 = scmp.eq.s32.totalorder %s13, 1
      %p56 = por %p54, %p55
      %p57 = scmp.ne.s32.totalorder %s49, %s52
      %p58 = scmp.eq.s32.totalorder %s13, 0
      %p59 = por %p57, %p58
      %p60 = scmp.ne.s32.totalorder %s49, %s52
      %p61 = scmp.eq.s32.totalorder %s18, 1
      %p62 = por %p60, %p61
      %p63 = scmp.ne.s32.totalorder %s52, %s53
      %p64 = scmp.eq.s32.totalorder %s18, 0
      %p65 = por %p63, %p64
      %p66 = scmp.ne.s32.totalorder %s52, %s53
      %p67 = scmp.eq.s32.totalorder %s19, 1
      %p68 = por %p66, %p67
      %p70 = scmp.ne.s32.totalorder %s53, %s69
      %p71 = scmp.eq.s32.totalorder %s19, 0
      %p72 = por %p70, %p71
      %p73 = scmp.le.s32.totalorder 1, %s13
      %p74 = scmp.lt.s32.totalorder %s13, 3
      %p75 = pnand %p73, %p74
      %p76 = pneg %p75
      // Predicated region
      $region9: #{tpu_custom_call.1} parent=5 // pred_check
        _
      $region10: #{tpu_custom_call.1} parent=5 // pred_check_branch
        %78 = sbr.rel (%p75) target = $region12
      $region11: #{tpu_custom_call.1} parent=5 // pred_region
        %s79 = ssub.s32 %s13, 1
      $region12: #{tpu_custom_call.1} parent=5 // pred_fallthru
        _
      %p80 = scmp.lt.s32.totalorder %s13, 2
      // Predicated region
      $region13: #{tpu_custom_call.1} parent=5 // pred_check
        %p81 = pneg %p80
      $region14: #{tpu_custom_call.1} parent=5 // pred_check_branch
        %83 = sbr.rel (%p81) target = $region16
      $region15: #{tpu_custom_call.1} parent=5 // pred_region
        // Predicated region
        $region17: #{tpu_custom_call.1} parent=15 // pred_check
          %p84 = pneg %p33
        $region18: #{tpu_custom_call.1} parent=15 // pred_check_branch
          %86 = sbr.rel (%p84) target = $region20
        $region19: #{tpu_custom_call.1} parent=15 // pred_region
          %s87 = sand.u32 %s23, 1
          %s88 = scalar_lea.sflag [#allocation3], %s87
          %s89 = sand.u32 %s23, 1
          %s90 = smul.addr %s89, 8
          %s91 = scalar_lea.vmem [#allocation2], %s90
          %93 = vsyncadd %s88, 0
          %s94 = smul.addr %s13, 2
          %s95 = smul.addr %s94, 4
          %s96 = scalar_lea.hbm %s0, %s95
          %s98 = sshll.u32 %s96, 4
          %s99 = int_to_ptr.hbm [resolvable:$true] %s98
          %s100 = sshll.u32 %s91, 4
          %s101 = int_to_ptr.vmem [resolvable:$true] %s100
          %103 = dma.hbm_to_vmem [thread:$0]  %s99, 128, %s101, %s88
        $region20: #{tpu_custom_call.1} parent=15 // pred_fallthru
          _
      $region16: #{tpu_custom_call.1} parent=5 // pred_fallthru
        _
      %p104 = scmp.le.s32.totalorder 1, %s13
      %p105 = scmp.lt.s32.totalorder %s13, 3
      %p106 = pnand %p104, %p105
      %p107 = pneg %p106
      // Predicated region
      $region21: #{tpu_custom_call.1} parent=5 // pred_check
        _
      $region22: #{tpu_custom_call.1} parent=5 // pred_check_branch
        %109 = sbr.rel (%p106) target = $region24
      $region23: #{tpu_custom_call.1} parent=5 // pred_region
        %s110 = ssub.s32 %s13, 1
        %s111 = sand.u32 %s26, 1
        %s112 = scalar_lea.sflag [#allocation3], %s111
        %s113 = sand.u32 %s26, 1
        %s114 = smul.addr %s113, 8
        %s115 = scalar_lea.vmem [#allocation2], %s114
        // Predicated region
        $region25: #{tpu_custom_call.1} parent=23 // pred_check
          %p116 = pneg %p39
        $region26: #{tpu_custom_call.1} parent=23 // pred_check_branch
          %118 = sbr.rel (%p116) target = $region28
        $region27: #{tpu_custom_call.1} parent=23 // pred_region
          %120 = dma.done %s112, 128
        $region28: #{tpu_custom_call.1} parent=23 // pred_fallthru
          _
        %s121 = sand.u32 %s26, 1
        %s122 = scalar_lea.sflag [#allocation3], %s121
        %s123 = sand.u32 %s26, 1
        %s124 = smul.addr %s123, 8
        %s125 = scalar_lea.vmem [#allocation2], %s124
        %p126 = pneg %p39
        %p127 = pneg %p36
        %p128 = pneg %p65
        %p129 = pneg %p62
        %s130 = sand.u32 %s52, 1
        %s131 = scalar_lea.sflag [#allocation4], %s130
        %s132 = sand.u32 %s52, 1
        %s133 = smul.addr %s132, 16
        %s134 = scalar_lea.vmem [#allocation5], %s133
        %v135 = vlaneseq
        %v136 = vand.u32 %v135, 127
        %v137 = vadd.s32 %v136, 128
        %vm138 = vcmp.lt.s32.totalorder %v136, 0
        %v139 = vsub.s32 0, %v136
        %v140 = vsel %vm138, %v139, %v136
        %v141 = vshrl.u32 %v140, 4
        %v142 = vand.u32 %v140, 15
        %v143 = vsub.s32 0, %v142
        %v144 = vsel %vm138, %v143, %v142
        %vm145 = vcmp.lt.s32.totalorder %v137, 0
        %v146 = vsub.s32 0, %v137
        %v147 = vsel %vm145, %v146, %v137
        %v148 = vshrl.u32 %v147, 4
        %v149 = vand.u32 %v147, 15
        %v150 = vsub.s32 0, %v149
        %v151 = vsel %vm145, %v150, %v149
        %vm152 = vcmp.ne.s32.totalorder %v144, 0
        %vm153 = vcmp.ne.s32.totalorder %v151, 0
        %vm154 = vcmp.lt.s32.totalorder %v144, 0
        %vm155 = vcmp.lt.s32.totalorder %v151, 0
        %vm156 = vmand %vm154, %vm152
        %vm157 = vmand %vm155, %vm153
        %v158 = vadd.s32 %v144, 16
        %v159 = vadd.s32 %v151, 16
        %v160 = vsel %vm156, %v158, %v144
        %v161 = vsel %vm157, %v159, %v151
        %vm162 = vcmp.ge.s32.totalorder %v160, 2
        %vm163 = vcmp.ge.s32.totalorder %v161, 2
        %vm164 = vcmp.lt.s32.totalorder %v160, 14
        %vm165 = vcmp.lt.s32.totalorder %v161, 14
        %vm166 = vcmp.ge.s32.totalorder %v136, 32
        %vm167 = vcmp.ge.s32.totalorder %v137, 32
        %vm168 = vcmp.lt.s32.totalorder %v136, 224
        %vm169 = vcmp.lt.s32.totalorder %v137, 224
        %v170 = vld [vmem:[%s115] sm:$0xff]
        %172 = vst [vmem:[#allocation1] ss:$2 sm:$0xff] %v170
        %v173 = vld.sshfl [vmem:[#allocation1] sm:$0xff pattern:$0x75316420]
        %v174 = vld.sshfl [vmem:[#allocation1 + $0x8] sm:$0xff pattern:$0x75316420]
        %vm177 = vcmask 1043456
        %v178 = vsel %vm177, %v173, 0.0
        %v179 = vrot.slane %v178, 4
        %v180 = vadd.f32 %v178, %v179
        %v181 = vrot.slane %v180, 2
        %v182 = vadd.f32 %v180, %v181
        %v183 = vrot.slane %v182, 1
        %v184 = vadd.f32 %v182, %v183
        %v185 = vsel %vm177, %v174, 0.0
        %v186 = vrot.slane %v185, 4
        %v187 = vadd.f32 %v185, %v186
        %v188 = vrot.slane %v187, 2
        %v189 = vadd.f32 %v187, %v188
        %v190 = vrot.slane %v189, 1
        %v191 = vadd.f32 %v189, %v190
        %v192 = vrcp.pop 4.0
        %v193 = vmul.f32 4.0, %v192
        %v194 = vsub.f32 1.0, %v193
        %v195 = vmul.f32 %v192, %v194
        %v196 = vadd.f32 %v192, %v195
        %vm197 = vweird.f32 %v192
        %v198 = vsel %vm197, %v192, %v196
        %v199 = vmul.f32 %v184, %v198
        %v200 = vmul.f32 %v191, %v198
        %201 = vrot.lane.b32.xlu0 %v199, 2
        %v202 = vpop.permute.xlu0 %201
        %203 = vrot.lane.b32.xlu0 %v200, 2
        %v204 = vpop.permute.xlu0 %203
        %vm205 = vcmp.lt.s32.totalorder %v136, 2
        %v206 = vsel %vm205, %v202, %v204
        %v207 = vsel %vm205, %v204, %v202
        %208 = vrot.lane.b32.xlu0 %v199, 126
        %v209 = vpop.permute.xlu0 %208
        %210 = vrot.lane.b32.xlu0 %v200, 126
        %v211 = vpop.permute.xlu0 %210
        %vm212 = vcmp.lt.s32.totalorder %v136, 126
        %v213 = vsel %vm212, %v209, %v211
        %v214 = vsel %vm212, %v211, %v209
        %215 = vrot.lane.b32.xlu0 %v199, 32
        %v216 = vpop.permute.xlu0 %215
        %217 = vrot.lane.b32.xlu0 %v200, 32
        %v218 = vpop.permute.xlu0 %217
        %vm219 = vcmp.lt.s32.totalorder %v136, 32
        %v220 = vsel %vm219, %v216, %v218
        %v221 = vsel %vm219, %v218, %v216
        %222 = vrot.lane.b32.xlu0 %v199, 96
        %v223 = vpop.permute.xlu0 %222
        %224 = vrot.lane.b32.xlu0 %v200, 96
        %v225 = vpop.permute.xlu0 %224
        %vm226 = vcmp.lt.s32.totalorder %v136, 96
        %v227 = vsel %vm226, %v223, %v225
        %v228 = vsel %vm226, %v225, %v223
        %v229 = vsel %vm162, %v207, 0.0
        %v230 = vsel %vm163, %v206, 0.0
        %v231 = vsel %vm164, %v213, 0.0
        %v232 = vsel %vm165, %v214, 0.0
        %v233 = vsel %vm166, %v221, 0.0
        %v234 = vsel %vm167, %v220, 0.0
        %v235 = vsel %vm168, %v227, 0.0
        %v236 = vsel %vm169, %v228, 0.0
        %v239 = vrot.slane %v231, 7
        %v240 = vrot.slane %v232, 7
        %v245 = vrot.slane %v233, 6
        %v246 = vrot.slane %v234, 6
        %v251 = vrot.slane %v235, 5
        %v252 = vrot.slane %v236, 5
        %vm255 = vcmask 1040384
        %v256 = vsel %vm255, %v229, %v239
        %v257 = vsel %vm255, %v230, %v240
        %vm258 = vcmask 1041408
        %v259 = vsel %vm258, %v256, %v245
        %v260 = vsel %vm258, %v257, %v246
        %vm261 = vcmask 1042432
        %v262 = vsel %vm261, %v259, %v251
        %v263 = vsel %vm261, %v260, %v252
        %264 = vst [vmem:[#allocation1] ss:$2 sm:$0xff] %v170
        %v265 = vld.sshfl [vmem:[#allocation1] sm:$0xff pattern:$0x75316420]
        %v266 = vld.sshfl [vmem:[#allocation1 + $0x8] sm:$0xff pattern:$0x75316420]
        %269 = vst [vmem:[%s134] sm:$0xf] %v265
        %270 = vst [vmem:[%s134 + $0x8] sm:$0xf] %v266
        %v273 = vrot.slane %v262, 4
        %v274 = vrot.slane %v263, 4
        %277 = vst [vmem:[%s134] sm:$0xf0] %v273
        %278 = vst [vmem:[%s134 + $0x8] sm:$0xf0] %v274
        %s279 = sand.u32 %s52, 1
        %s280 = scalar_lea.sflag [#allocation4], %s279
        %s281 = sand.u32 %s52, 1
        %s282 = smul.addr %s281, 16
        %s283 = scalar_lea.vmem [#allocation5], %s282
        // Predicated region
        $region29: #{tpu_custom_call.1} parent=23 // pred_check
          %p284 = pneg %p62
        $region30: #{tpu_custom_call.1} parent=23 // pred_check_branch
          %286 = sbr.rel (%p284) target = $region32
        $region31: #{tpu_custom_call.1} parent=23 // pred_region
          %288 = vsyncadd %s280, 0
          %s289 = smul.addr %s18, 2
          %s290 = smul.addr %s289, 8
          %s291 = scalar_lea.hbm %s1, %s290
          %s293 = sshll.u32 %s283, 4
          %s294 = int_to_ptr.vmem [resolvable:$true] %s293
          %s295 = sshll.u32 %s291, 4
          %s296 = int_to_ptr.hbm [resolvable:$true] %s295
          %298 = dma.vmem_to_hbm [thread:$0]  %s294, 256, %s296, %s280
        $region32: #{tpu_custom_call.1} parent=23 // pred_fallthru
          _
      $region24: #{tpu_custom_call.1} parent=5 // pred_fallthru
        _
      %p299 = scmp.le.s32.totalorder 2, %s13
      // Predicated region
      $region33: #{tpu_custom_call.1} parent=5 // pred_check
        %p300 = pneg %p299
      $region34: #{tpu_custom_call.1} parent=5 // pred_check_branch
        %302 = sbr.rel (%p300) target = $region36
      $region35: #{tpu_custom_call.1} parent=5 // pred_region
        %s303 = ssub.s32 %s13, 2
        // Predicated region
        $region37: #{tpu_custom_call.1} parent=35 // pred_check
          %p304 = pneg %p68
        $region38: #{tpu_custom_call.1} parent=35 // pred_check_branch
          %306 = sbr.rel (%p304) target = $region40
        $region39: #{tpu_custom_call.1} parent=35 // pred_region
          %s307 = sand.u32 %s53, 1
          %s308 = scalar_lea.sflag [#allocation4], %s307
          %s309 = sand.u32 %s53, 1
          %s310 = smul.addr %s309, 16
          %s311 = scalar_lea.vmem [#allocation5], %s310
          %313 = dma.done %s308, 256
        $region40: #{tpu_custom_call.1} parent=35 // pred_fallthru
          _
      $region36: #{tpu_custom_call.1} parent=5 // pred_fallthru
        _
    $region6: #{tpu_custom_call.1} parent=1 // loop_footer
      %s17 = sadd.s32 1, %s13
    $region7: #{tpu_custom_call.1} parent=1 // loop_footer_branch
      %12 = sbr.rel target = $region3
    $region8: #{tpu_custom_call.1} parent=1 // loop_exit
      _
    %314 = vsyncpa [#allocation3], 1
    %s315 = scalar_lea.sflag [#allocation3], 1
    %316 = vsyncpa %s315, 1
    %317 = vsyncpa [#allocation4], 1
    %s318 = scalar_lea.sflag [#allocation4], 1
    %319 = vsyncpa %s318, 1

</llo_original>
